<compile_context>
chip_gen: v7x
topology: tpu7x:2x2x1
jax: 0.10.0
libtpu: 0.0.40
codegen_flags: <defaults>
</compile_context>

<pallas_src>
import math
import jax
import jax.numpy as jnp
from jax import lax
from jax.experimental import pallas as pl
from jax.experimental.pallas import tpu as pltpu


def _pick_group_size(num_heads, head_width):
    """Smallest divisor G of H with G*W >= 256 (MXU-friendly, lane-dense stores);
    falls back to G = H for small dims (e.g. the self-test)."""
    for g in range(1, num_heads + 1):
        if num_heads % g == 0 and g * head_width >= 256:
            return g
    return num_heads


def multi_headed_self_attention(x, mask, params, num_heads, *,
                                return_scores=True,
                                scores_dtype=jnp.bfloat16,
                                group_size=None):
    """x: (B,S,D) float, mask: (B,S) (1=keep, 0=mask).

    Returns (h, scores) with h: (B,S,D) f32 and scores: (B,H,S,S) in
    `scores_dtype`; returns just h if return_scores=False.
    """
    B, S, D = x.shape
    H = num_heads
    W = D // H
    assert H * W == D, "dim must be divisible by num_heads"
    G = group_size if group_size is not None else _pick_group_size(H, W)
    assert H % G == 0, "group_size must divide num_heads"
    NG = H // G
    GW = G * W
    scale = 1.0 / math.sqrt(W)
    wq, bq, wk, bk, wv, bv = params

    # PyTorch Linear is y = x @ W.T + b.  Pre-transpose to (D_in, D_out); the
    # output dim is head-major, so group g owns columns [g*GW, (g+1)*GW).
    # Fuse [Q | K | V] per group into one (D, 3*GW) bf16 block and fold the
    # 1/sqrt(W) attention scale into the Q path.
    def per_group(w_t):                                   # (D, D) -> (NG, D, GW)
        return jnp.transpose(w_t.reshape(D, NG, GW), (1, 0, 2))

    wqkv = jnp.concatenate(
        [per_group(wq.T * scale), per_group(wk.T), per_group(wv.T)],
        axis=-1).astype(jnp.bfloat16)                     # (NG, D, 3*GW)
    bqkv = jnp.concatenate(
        [(bq * scale).reshape(NG, 1, GW),
         bk.reshape(NG, 1, GW),
         bv.reshape(NG, 1, GW)],
        axis=-1).astype(jnp.float32)                      # (NG, 1, 3*GW)

    x_bf16 = x.astype(jnp.bfloat16)                       # halve x DMA, cast once
    # Additive mask penalty precomputed: 0 (keep) / -10000 (masked).
    mask_bias = ((mask.astype(jnp.float32) - 1.0) * 10000.0)[:, None, :]   # (B,1,S)

    def kernel(x_ref, bias_ref, w_ref, b_ref, out_ref, scores_ref=None):
        # Blocks: x (1,S,D) bf16; bias (1,1,S) f32; w (1,D,3GW) bf16;
        #         b (1,1,3GW) f32; out (1,S,GW) f32; scores (1,G,S,S).
        x_t = x_ref[0]                                                  # (S, D) bf16
        # Fused QKV projection: one wide MXU matmul (N = 3*GW), f32 accumulate.
        qkv = jnp.dot(x_t, w_ref[0], preferred_element_type=jnp.float32)
        qkv = (qkv + b_ref[0]).astype(jnp.bfloat16)                     # single cast pass
        bias_row = bias_ref[0]                                          # (1, S) f32

        for h in range(G):                                # static unroll over group heads
            q_h = qkv[:, h * W:(h + 1) * W]                             # (S, W) bf16
            k_h = qkv[:, GW + h * W:GW + (h + 1) * W]                   # (S, W) bf16
            v_h = qkv[:, 2 * GW + h * W:2 * GW + (h + 1) * W]           # (S, W) bf16
            # QK^T: contract the W dims directly (no explicit transpose).
            s = lax.dot_general(q_h, k_h, (((1,), (1,)), ((), ())),
                                preferred_element_type=jnp.float32)     # (S, S) f32
            s = s + bias_row                                            # additive mask
            # Softmax along keys, f32; reciprocal on the EUP approx slot.
            m = jnp.max(s, axis=-1, keepdims=True)
            e = jnp.exp(s - m)
            p = e * pl.reciprocal(jnp.sum(e, axis=-1, keepdims=True), approx=True)
            if scores_ref is not None:
                scores_ref[0, h] = p.astype(scores_ref.dtype)
            # TODO(synk): dropout on attention probabilities skipped (eval-mode identity).
            ctx = jnp.dot(p.astype(jnp.bfloat16), v_h,
                          preferred_element_type=jnp.float32)           # (S, W) f32
            # Write the head's columns of the final (B,S,D) layout; the HBM
            # writeback of the whole (1,S,GW) block stays lane-dense.
            out_ref[0, :, h * W:(h + 1) * W] = ctx.astype(out_ref.dtype)

    # Grid: (group, batch).  Batch is the inner axis so the (large) weight
    # block index is invariant over it (fetched once per group); x/mask blocks
    # are small and cheap to re-stream.
    out_shapes = [jax.ShapeDtypeStruct((B, S, D), jnp.float32)]
    out_specs = [pl.BlockSpec((1, S, GW), lambda g, b: (b, 0, g))]
    if return_scores:
        out_shapes.append(jax.ShapeDtypeStruct((B, H, S, S), scores_dtype))
        out_specs.append(pl.BlockSpec((1, G, S, S), lambda g, b: (b, g, 0, 0)))

    results = pl.pallas_call(
        kernel,
        out_shape=tuple(out_shapes),
        grid=(NG, B),
        in_specs=[
            pl.BlockSpec((1, S, D), lambda g, b: (b, 0, 0)),      # x (bf16)
            pl.BlockSpec((1, 1, S), lambda g, b: (b, 0, 0)),      # mask bias
            pl.BlockSpec((1, D, 3 * GW), lambda g, b: (g, 0, 0)),  # fused QKV weights (bf16)
            pl.BlockSpec((1, 1, 3 * GW), lambda g, b: (g, 0, 0)),  # fused QKV biases
        ],
        out_specs=tuple(out_specs),
        compiler_params=pltpu.CompilerParams(
            # Both axes independent -> megacore can shard (group, batch) over
            # the two TensorCores on v7x; harmless elsewhere.
            dimension_semantics=("parallel", "parallel"),
            # Per-step residency stays small at ViT scale; keep the scoped
            # limit at 32 MiB so tile choices also fit v7x's 64 MiB physical.
            vmem_limit_bytes=32 * 1024 * 1024),
    )(x_bf16, mask_bias, wqkv, bqkv)

    if return_scores:
        h_out, scores = results
        return h_out, scores
    return results[0]


def reference(x, mask, params, num_heads):
    """Pure-JAX f32 reference mirroring the PyTorch forward (eval mode)."""
    B, S, D = x.shape
    W = D // num_heads
    wq, bq, wk, bk, wv, bv = params
    q = x @ wq.T + bq
    k = x @ wk.T + bk
    v = x @ wv.T + bv
    split = lambda t: t.reshape(B, S, num_heads, W).transpose(0, 2, 1, 3)
    q, k, v = split(q), split(k), split(v)
    scores = jnp.einsum('bhqw,bhkw->bhqk', q, k) / math.sqrt(W)
    m = mask[:, None, None, :].astype(jnp.float32)
    scores = scores - 10000.0 * (1.0 - m)
    scores = jax.nn.softmax(scores, axis=-1)
    h = jnp.einsum('bhqk,bhkw->bhqw', scores, v)
    h = h.transpose(0, 2, 1, 3).reshape(B, S, D)
    return h, scores


if __name__ == "__main__":
    B, S, D, H = 2, 8, 32, 4
    key = jax.random.PRNGKey(0)
    kx, kq, kk, kv, kbq, kbk, kbv, km = jax.random.split(key, 8)

    x = jax.random.normal(kx, (B, S, D), dtype=jnp.float32)
    # mask: 1 = attend, 0 = masked; mask the last two positions of batch 1
    mask = jnp.ones((B, S), dtype=jnp.float32).at[1, -2:].set(0.0)

    s = 1.0 / math.sqrt(D)
    params = (
        jax.random.uniform(kq, (D, D), minval=-s, maxval=s),   # Wq (out,in)
        jax.random.uniform(kbq, (D,), minval=-s, maxval=s),    # bq
        jax.random.uniform(kk, (D, D), minval=-s, maxval=s),   # Wk
        jax.random.uniform(kbk, (D,), minval=-s, maxval=s),    # bk
        jax.random.uniform(kv, (D, D), minval=-s, maxval=s),   # Wv
        jax.random.uniform(kbv, (D,), minval=-s, maxval=s),    # bv
    )

    h_out, scores_out = multi_headed_self_attention(x, mask, params, H)
    jax.block_until_ready(h_out)
    jax.block_until_ready(scores_out)

    h_ref, scores_ref = reference(x, mask, params, H)
    # bf16 MXU operands, bf16 scores store, approx reciprocal -> 1e-2 tolerance.
    assert jnp.allclose(h_out, h_ref, atol=1e-2, rtol=1e-2)
    assert jnp.allclose(scores_out.astype(jnp.float32), scores_ref, atol=1e-2, rtol=1e-2)

    print("KERNEL_OK")
</pallas_src>

<mosaic_0001>
module attributes {stable_mosaic.version = 11 : i64} {
  func.func @kernel(%arg0: i32, %arg1: i32, %arg2: memref<1x8x32xbf16, #tpu.memory_space<vmem>>, %arg3: memref<1x1x8xf32, #tpu.memory_space<vmem>>, %arg4: memref<1x32x96xbf16, #tpu.memory_space<vmem>>, %arg5: memref<1x1x96xf32, #tpu.memory_space<vmem>>, %arg6: memref<1x8x32xf32, #tpu.memory_space<vmem>>, %arg7: memref<1x4x8x8xbf16, #tpu.memory_space<vmem>>) attributes {dimension_semantics = [#tpu.dimension_semantics<parallel>, #tpu.dimension_semantics<parallel>], iteration_bounds = array<i64: 1, 2>, scalar_prefetch = 0 : i64, scratch_operands = 0 : i64, tpu.core_type = #tpu.core_type<tc>, window_params = [{transform_indices = @transform_0, window_bounds = array<i64: 1, 8, 32>}, {transform_indices = @transform_1, window_bounds = array<i64: 1, 1, 8>}, {transform_indices = @transform_2, window_bounds = array<i64: 1, 32, 96>}, {transform_indices = @transform_3, window_bounds = array<i64: 1, 1, 96>}, {transform_indices = @transform_4, window_bounds = array<i64: 1, 8, 32>}, {transform_indices = @transform_5, window_bounds = array<i64: 1, 4, 8, 8>}]} {
    %c0 = arith.constant 0 : index
    %c0_0 = arith.constant 0 : index
    %c0_1 = arith.constant 0 : index
    %0 = vector.load %arg2[%c0, %c0_0, %c0_1] : memref<1x8x32xbf16, #tpu.memory_space<vmem>>, vector<1x8x32xbf16>
    %1 = vector.shape_cast %0 : vector<1x8x32xbf16> to vector<8x32xbf16>
    %c0_2 = arith.constant 0 : index
    %c0_3 = arith.constant 0 : index
    %c0_4 = arith.constant 0 : index
    %2 = vector.load %arg4[%c0_2, %c0_3, %c0_4] : memref<1x32x96xbf16, #tpu.memory_space<vmem>>, vector<1x32x96xbf16>
    %3 = vector.shape_cast %2 : vector<1x32x96xbf16> to vector<32x96xbf16>
    %cst = arith.constant dense<0.000000e+00> : vector<8x96xf32>
    %4 = tpu.matmul %1, %3, %cst {dimension_numbers = #tpu.dot_dimension_numbers<[1], [0], [0], [1], [0, 0, 1, 1], [], []>} : vector<8x32xbf16>, vector<32x96xbf16>, vector<8x96xf32> -> vector<8x96xf32>
    %c0_5 = arith.constant 0 : index
    %c0_6 = arith.constant 0 : index
    %c0_7 = arith.constant 0 : index
    %5 = vector.load %arg5[%c0_5, %c0_6, %c0_7] : memref<1x1x96xf32, #tpu.memory_space<vmem>>, vector<1x1x96xf32>
    %6 = vector.shape_cast %5 : vector<1x1x96xf32> to vector<1x96xf32>
    %7 = vector.broadcast %6 : vector<1x96xf32> to vector<8x96xf32>
    %8 = arith.addf %4, %7 : vector<8x96xf32>
    %9 = arith.truncf %8 : vector<8x96xf32> to vector<8x96xbf16>
    %c0_8 = arith.constant 0 : index
    %c0_9 = arith.constant 0 : index
    %c0_10 = arith.constant 0 : index
    %10 = vector.load %arg3[%c0_8, %c0_9, %c0_10] : memref<1x1x8xf32, #tpu.memory_space<vmem>>, vector<1x1x8xf32>
    %11 = vector.shape_cast %10 : vector<1x1x8xf32> to vector<1x8xf32>
    %12 = vector.extract_strided_slice %9 {offsets = [0, 0], sizes = [8, 8], strides = [1, 1]} : vector<8x96xbf16> to vector<8x8xbf16>
    %13 = vector.extract_strided_slice %9 {offsets = [0, 32], sizes = [8, 8], strides = [1, 1]} : vector<8x96xbf16> to vector<8x8xbf16>
    %14 = vector.extract_strided_slice %9 {offsets = [0, 64], sizes = [8, 8], strides = [1, 1]} : vector<8x96xbf16> to vector<8x8xbf16>
    %cst_11 = arith.constant dense<0.000000e+00> : vector<8x8xf32>
    %15 = tpu.matmul %12, %13, %cst_11 {dimension_numbers = #tpu.dot_dimension_numbers<[1], [1], [0], [0], [0, 0, 1, 0], [], []>} : vector<8x8xbf16>, vector<8x8xbf16>, vector<8x8xf32> -> vector<8x8xf32>
    %16 = vector.broadcast %11 : vector<1x8xf32> to vector<8x8xf32>
    %17 = arith.addf %15, %16 : vector<8x8xf32>
    %cst_12 = arith.constant dense<0xFF800000> : vector<8xf32>
    %18 = vector.multi_reduction <maximumf>, %17, %cst_12 [1] : vector<8x8xf32> to vector<8xf32>
    %19 = vector.shape_cast %18 : vector<8xf32> to vector<8x1xf32>
    %20 = vector.broadcast %19 : vector<8x1xf32> to vector<8x8xf32>
    %21 = arith.subf %17, %20 : vector<8x8xf32>
    %22 = math.exp %21 : vector<8x8xf32>
    %cst_13 = arith.constant dense<0.000000e+00> : vector<8xf32>
    %23 = vector.multi_reduction <add>, %22, %cst_13 [1] : vector<8x8xf32> to vector<8xf32>
    %24 = vector.shape_cast %23 : vector<8xf32> to vector<8x1xf32>
    %25 = tpu.reciprocal %24 {approx = true} : vector<8x1xf32> -> vector<8x1xf32>
    %26 = vector.broadcast %25 : vector<8x1xf32> to vector<8x8xf32>
    %27 = arith.mulf %22, %26 : vector<8x8xf32>
    %28 = arith.truncf %27 : vector<8x8xf32> to vector<8x8xbf16>
    %c0_14 = arith.constant 0 : index
    %c0_15 = arith.constant 0 : index
    %c0_16 = arith.constant 0 : index
    %c0_17 = arith.constant 0 : index
    %29 = vector.load %arg7[%c0_14, %c0_15, %c0_16, %c0_17] : memref<1x4x8x8xbf16, #tpu.memory_space<vmem>>, vector<1x1x8x8xbf16>
    %30 = vector.shape_cast %29 : vector<1x1x8x8xbf16> to vector<8x8xbf16>
    %31 = vector.shape_cast %28 : vector<8x8xbf16> to vector<1x1x8x8xbf16>
    tpu.vector_store %arg7[%c0_14, %c0_15, %c0_16, %c0_17], %31 {strides = array<i32>} : memref<1x4x8x8xbf16, #tpu.memory_space<vmem>>, vector<1x1x8x8xbf16>,
    %32 = arith.truncf %27 : vector<8x8xf32> to vector<8x8xbf16>
    %cst_18 = arith.constant dense<0.000000e+00> : vector<8x8xf32>
    %33 = tpu.matmul %32, %14, %cst_18 {dimension_numbers = #tpu.dot_dimension_numbers<[1], [0], [0], [1], [0, 0, 1, 1], [], []>} : vector<8x8xbf16>, vector<8x8xbf16>, vector<8x8xf32> -> vector<8x8xf32>
    %c0_19 = arith.constant 0 : index
    %c0_20 = arith.constant 0 : index
    %c0_21 = arith.constant 0 : index
    %34 = vector.load %arg6[%c0_19, %c0_20, %c0_21] : memref<1x8x32xf32, #tpu.memory_space<vmem>>, vector<1x8x8xf32>
    %35 = vector.shape_cast %34 : vector<1x8x8xf32> to vector<8x8xf32>
    %36 = vector.shape_cast %33 : vector<8x8xf32> to vector<1x8x8xf32>
    tpu.vector_store %arg6[%c0_19, %c0_20, %c0_21], %36 {strides = array<i32>} : memref<1x8x32xf32, #tpu.memory_space<vmem>>, vector<1x8x8xf32>,
    %37 = vector.extract_strided_slice %9 {offsets = [0, 8], sizes = [8, 8], strides = [1, 1]} : vector<8x96xbf16> to vector<8x8xbf16>
    %38 = vector.extract_strided_slice %9 {offsets = [0, 40], sizes = [8, 8], strides = [1, 1]} : vector<8x96xbf16> to vector<8x8xbf16>
    %39 = vector.extract_strided_slice %9 {offsets = [0, 72], sizes = [8, 8], strides = [1, 1]} : vector<8x96xbf16> to vector<8x8xbf16>
    %cst_22 = arith.constant dense<0.000000e+00> : vector<8x8xf32>
    %40 = tpu.matmul %37, %38, %cst_22 {dimension_numbers = #tpu.dot_dimension_numbers<[1], [1], [0], [0], [0, 0, 1, 0], [], []>} : vector<8x8xbf16>, vector<8x8xbf16>, vector<8x8xf32> -> vector<8x8xf32>
    %41 = vector.broadcast %11 : vector<1x8xf32> to vector<8x8xf32>
    %42 = arith.addf %40, %41 : vector<8x8xf32>
    %cst_23 = arith.constant dense<0xFF800000> : vector<8xf32>
    %43 = vector.multi_reduction <maximumf>, %42, %cst_23 [1] : vector<8x8xf32> to vector<8xf32>
    %44 = vector.shape_cast %43 : vector<8xf32> to vector<8x1xf32>
    %45 = vector.broadcast %44 : vector<8x1xf32> to vector<8x8xf32>
    %46 = arith.subf %42, %45 : vector<8x8xf32>
    %47 = math.exp %46 : vector<8x8xf32>
    %cst_24 = arith.constant dense<0.000000e+00> : vector<8xf32>
    %48 = vector.multi_reduction <add>, %47, %cst_24 [1] : vector<8x8xf32> to vector<8xf32>
    %49 = vector.shape_cast %48 : vector<8xf32> to vector<8x1xf32>
    %50 = tpu.reciprocal %49 {approx = true} : vector<8x1xf32> -> vector<8x1xf32>
    %51 = vector.broadcast %50 : vector<8x1xf32> to vector<8x8xf32>
    %52 = arith.mulf %47, %51 : vector<8x8xf32>
    %53 = arith.truncf %52 : vector<8x8xf32> to vector<8x8xbf16>
    %c0_25 = arith.constant 0 : index
    %c1 = arith.constant 1 : index
    %c0_26 = arith.constant 0 : index
    %c0_27 = arith.constant 0 : index
    %54 = vector.load %arg7[%c0_25, %c1, %c0_26, %c0_27] : memref<1x4x8x8xbf16, #tpu.memory_space<vmem>>, vector<1x1x8x8xbf16>
    %55 = vector.shape_cast %54 : vector<1x1x8x8xbf16> to vector<8x8xbf16>
    %56 = vector.shape_cast %53 : vector<8x8xbf16> to vector<1x1x8x8xbf16>
    tpu.vector_store %arg7[%c0_25, %c1, %c0_26, %c0_27], %56 {strides = array<i32>} : memref<1x4x8x8xbf16, #tpu.memory_space<vmem>>, vector<1x1x8x8xbf16>,
    %57 = arith.truncf %52 : vector<8x8xf32> to vector<8x8xbf16>
    %cst_28 = arith.constant dense<0.000000e+00> : vector<8x8xf32>
    %58 = tpu.matmul %57, %39, %cst_28 {dimension_numbers = #tpu.dot_dimension_numbers<[1], [0], [0], [1], [0, 0, 1, 1], [], []>} : vector<8x8xbf16>, vector<8x8xbf16>, vector<8x8xf32> -> vector<8x8xf32>
    %c0_29 = arith.constant 0 : index
    %c0_30 = arith.constant 0 : index
    %c8 = arith.constant 8 : index
    %59 = vector.load %arg6[%c0_29, %c0_30, %c8] : memref<1x8x32xf32, #tpu.memory_space<vmem>>, vector<1x8x8xf32>
    %60 = vector.shape_cast %59 : vector<1x8x8xf32> to vector<8x8xf32>
    %61 = vector.shape_cast %58 : vector<8x8xf32> to vector<1x8x8xf32>
    tpu.vector_store %arg6[%c0_29, %c0_30, %c8], %61 {strides = array<i32>} : memref<1x8x32xf32, #tpu.memory_space<vmem>>, vector<1x8x8xf32>,
    %62 = vector.extract_strided_slice %9 {offsets = [0, 16], sizes = [8, 8], strides = [1, 1]} : vector<8x96xbf16> to vector<8x8xbf16>
    %63 = vector.extract_strided_slice %9 {offsets = [0, 48], sizes = [8, 8], strides = [1, 1]} : vector<8x96xbf16> to vector<8x8xbf16>
    %64 = vector.extract_strided_slice %9 {offsets = [0, 80], sizes = [8, 8], strides = [1, 1]} : vector<8x96xbf16> to vector<8x8xbf16>
    %cst_31 = arith.constant dense<0.000000e+00> : vector<8x8xf32>
    %65 = tpu.matmul %62, %63, %cst_31 {dimension_numbers = #tpu.dot_dimension_numbers<[1], [1], [0], [0], [0, 0, 1, 0], [], []>} : vector<8x8xbf16>, vector<8x8xbf16>, vector<8x8xf32> -> vector<8x8xf32>
    %66 = vector.broadcast %11 : vector<1x8xf32> to vector<8x8xf32>
    %67 = arith.addf %65, %66 : vector<8x8xf32>
    %cst_32 = arith.constant dense<0xFF800000> : vector<8xf32>
    %68 = vector.multi_reduction <maximumf>, %67, %cst_32 [1] : vector<8x8xf32> to vector<8xf32>
    %69 = vector.shape_cast %68 : vector<8xf32> to vector<8x1xf32>
    %70 = vector.broadcast %69 : vector<8x1xf32> to vector<8x8xf32>
    %71 = arith.subf %67, %70 : vector<8x8xf32>
    %72 = math.exp %71 : vector<8x8xf32>
    %cst_33 = arith.constant dense<0.000000e+00> : vector<8xf32>
    %73 = vector.multi_reduction <add>, %72, %cst_33 [1] : vector<8x8xf32> to vector<8xf32>
    %74 = vector.shape_cast %73 : vector<8xf32> to vector<8x1xf32>
    %75 = tpu.reciprocal %74 {approx = true} : vector<8x1xf32> -> vector<8x1xf32>
    %76 = vector.broadcast %75 : vector<8x1xf32> to vector<8x8xf32>
    %77 = arith.mulf %72, %76 : vector<8x8xf32>
    %78 = arith.truncf %77 : vector<8x8xf32> to vector<8x8xbf16>
    %c0_34 = arith.constant 0 : index
    %c2 = arith.constant 2 : index
    %c0_35 = arith.constant 0 : index
    %c0_36 = arith.constant 0 : index
    %79 = vector.load %arg7[%c0_34, %c2, %c0_35, %c0_36] : memref<1x4x8x8xbf16, #tpu.memory_space<vmem>>, vector<1x1x8x8xbf16>
    %80 = vector.shape_cast %79 : vector<1x1x8x8xbf16> to vector<8x8xbf16>
    %81 = vector.shape_cast %78 : vector<8x8xbf16> to vector<1x1x8x8xbf16>
    tpu.vector_store %arg7[%c0_34, %c2, %c0_35, %c0_36], %81 {strides = array<i32>} : memref<1x4x8x8xbf16, #tpu.memory_space<vmem>>, vector<1x1x8x8xbf16>,
    %82 = arith.truncf %77 : vector<8x8xf32> to vector<8x8xbf16>
    %cst_37 = arith.constant dense<0.000000e+00> : vector<8x8xf32>
    %83 = tpu.matmul %82, %64, %cst_37 {dimension_numbers = #tpu.dot_dimension_numbers<[1], [0], [0], [1], [0, 0, 1, 1], [], []>} : vector<8x8xbf16>, vector<8x8xbf16>, vector<8x8xf32> -> vector<8x8xf32>
    %c0_38 = arith.constant 0 : index
    %c0_39 = arith.constant 0 : index
    %c16 = arith.constant 16 : index
    %84 = vector.load %arg6[%c0_38, %c0_39, %c16] : memref<1x8x32xf32, #tpu.memory_space<vmem>>, vector<1x8x8xf32>
    %85 = vector.shape_cast %84 : vector<1x8x8xf32> to vector<8x8xf32>
    %86 = vector.shape_cast %83 : vector<8x8xf32> to vector<1x8x8xf32>
    tpu.vector_store %arg6[%c0_38, %c0_39, %c16], %86 {strides = array<i32>} : memref<1x8x32xf32, #tpu.memory_space<vmem>>, vector<1x8x8xf32>,
    %87 = vector.extract_strided_slice %9 {offsets = [0, 24], sizes = [8, 8], strides = [1, 1]} : vector<8x96xbf16> to vector<8x8xbf16>
    %88 = vector.extract_strided_slice %9 {offsets = [0, 56], sizes = [8, 8], strides = [1, 1]} : vector<8x96xbf16> to vector<8x8xbf16>
    %89 = vector.extract_strided_slice %9 {offsets = [0, 88], sizes = [8, 8], strides = [1, 1]} : vector<8x96xbf16> to vector<8x8xbf16>
    %cst_40 = arith.constant dense<0.000000e+00> : vector<8x8xf32>
    %90 = tpu.matmul %87, %88, %cst_40 {dimension_numbers = #tpu.dot_dimension_numbers<[1], [1], [0], [0], [0, 0, 1, 0], [], []>} : vector<8x8xbf16>, vector<8x8xbf16>, vector<8x8xf32> -> vector<8x8xf32>
    %91 = vector.broadcast %11 : vector<1x8xf32> to vector<8x8xf32>
    %92 = arith.addf %90, %91 : vector<8x8xf32>
    %cst_41 = arith.constant dense<0xFF800000> : vector<8xf32>
    %93 = vector.multi_reduction <maximumf>, %92, %cst_41 [1] : vector<8x8xf32> to vector<8xf32>
    %94 = vector.shape_cast %93 : vector<8xf32> to vector<8x1xf32>
    %95 = vector.broadcast %94 : vector<8x1xf32> to vector<8x8xf32>
    %96 = arith.subf %92, %95 : vector<8x8xf32>
    %97 = math.exp %96 : vector<8x8xf32>
    %cst_42 = arith.constant dense<0.000000e+00> : vector<8xf32>
    %98 = vector.multi_reduction <add>, %97, %cst_42 [1] : vector<8x8xf32> to vector<8xf32>
    %99 = vector.shape_cast %98 : vector<8xf32> to vector<8x1xf32>
    %100 = tpu.reciprocal %99 {approx = true} : vector<8x1xf32> -> vector<8x1xf32>
    %101 = vector.broadcast %100 : vector<8x1xf32> to vector<8x8xf32>
    %102 = arith.mulf %97, %101 : vector<8x8xf32>
    %103 = arith.truncf %102 : vector<8x8xf32> to vector<8x8xbf16>
    %c0_43 = arith.constant 0 : index
    %c3 = arith.constant 3 : index
    %c0_44 = arith.constant 0 : index
    %c0_45 = arith.constant 0 : index
    %104 = vector.load %arg7[%c0_43, %c3, %c0_44, %c0_45] : memref<1x4x8x8xbf16, #tpu.memory_space<vmem>>, vector<1x1x8x8xbf16>
    %105 = vector.shape_cast %104 : vector<1x1x8x8xbf16> to vector<8x8xbf16>
    %106 = vector.shape_cast %103 : vector<8x8xbf16> to vector<1x1x8x8xbf16>
    tpu.vector_store %arg7[%c0_43, %c3, %c0_44, %c0_45], %106 {strides = array<i32>} : memref<1x4x8x8xbf16, #tpu.memory_space<vmem>>, vector<1x1x8x8xbf16>,
    %107 = arith.truncf %102 : vector<8x8xf32> to vector<8x8xbf16>
    %cst_46 = arith.constant dense<0.000000e+00> : vector<8x8xf32>
    %108 = tpu.matmul %107, %89, %cst_46 {dimension_numbers = #tpu.dot_dimension_numbers<[1], [0], [0], [1], [0, 0, 1, 1], [], []>} : vector<8x8xbf16>, vector<8x8xbf16>, vector<8x8xf32> -> vector<8x8xf32>
    %c0_47 = arith.constant 0 : index
    %c0_48 = arith.constant 0 : index
    %c24 = arith.constant 24 : index
    %109 = vector.load %arg6[%c0_47, %c0_48, %c24] : memref<1x8x32xf32, #tpu.memory_space<vmem>>, vector<1x8x8xf32>
    %110 = vector.shape_cast %109 : vector<1x8x8xf32> to vector<8x8xf32>
    %111 = vector.shape_cast %108 : vector<8x8xf32> to vector<1x8x8xf32>
    tpu.vector_store %arg6[%c0_47, %c0_48, %c24], %111 {strides = array<i32>} : memref<1x8x32xf32, #tpu.memory_space<vmem>>, vector<1x8x8xf32>,
    return
  }
  func.func @transform_0(%arg0: i32, %arg1: i32) -> (i32, i32, i32) {
    %c0_i32 = arith.constant 0 : i32
    %c0_i32_0 = arith.constant 0 : i32
    %c0_i32_1 = arith.constant 0 : i32
    return %arg1, %c0_i32, %c0_i32_0 : i32, i32, i32
  }
  func.func @transform_1(%arg0: i32, %arg1: i32) -> (i32, i32, i32) {
    %c0_i32 = arith.constant 0 : i32
    %c0_i32_0 = arith.constant 0 : i32
    %c0_i32_1 = arith.constant 0 : i32
    return %arg1, %c0_i32, %c0_i32_0 : i32, i32, i32
  }
  func.func @transform_2(%arg0: i32, %arg1: i32) -> (i32, i32, i32) {
    %c0_i32 = arith.constant 0 : i32
    %c0_i32_0 = arith.constant 0 : i32
    %c0_i32_1 = arith.constant 0 : i32
    return %arg0, %c0_i32, %c0_i32_0 : i32, i32, i32
  }
  func.func @transform_3(%arg0: i32, %arg1: i32) -> (i32, i32, i32) {
    %c0_i32 = arith.constant 0 : i32
    %c0_i32_0 = arith.constant 0 : i32
    %c0_i32_1 = arith.constant 0 : i32
    return %arg0, %c0_i32, %c0_i32_0 : i32, i32, i32
  }
  func.func @transform_4(%arg0: i32, %arg1: i32) -> (i32, i32, i32) {
    %c0_i32 = arith.constant 0 : i32
    %c0_i32_0 = arith.constant 0 : i32
    return %arg1, %c0_i32, %arg0 : i32, i32, i32
  }
  func.func @transform_5(%arg0: i32, %arg1: i32) -> (i32, i32, i32, i32) {
    %c0_i32 = arith.constant 0 : i32
    %c0_i32_0 = arith.constant 0 : i32
    %c0_i32_1 = arith.constant 0 : i32
    return %arg1, %arg0, %c0_i32, %c0_i32_0 : i32, i32, i32, i32
  }
}

</mosaic_0001>

<llo_original>
// kernel: tpu_custom_call.1
$region0: #{tpu_custom_call.1}
  #allocation0 [shape = 'u32[]', space=smem, size = 0x4, offset = 0x4, fixed_abs, tag = 'smem constant byte address 0x4 - core index']
  #allocation1 [shape = 'u32[144,128]{1,0:T(1,128)}', space=vmem, size = 0x12000, scoped, tag = 'internal scratch']
  %s0 = inlined_call_operand.hbm [shape: bf16[2,8,32], index: 0, kind: input, shape index: {}]
  %s1 = inlined_call_operand.vmem [shape: f32[2,1,8], index: 1, kind: input, shape index: {}]
  %s2 = inlined_call_operand.hbm [shape: bf16[1,32,96], index: 2, kind: input, shape index: {}]
  %s3 = inlined_call_operand.vmem [shape: f32[1,1,96], index: 3, kind: input, shape index: {}]
  %s4 = inlined_call_operand.hbm [shape: f32[2,8,32], index: 4, kind: output, shape index: {0}]
  %s5 = inlined_call_operand.hbm [shape: bf16[2,4,8,8], index: 5, kind: output, shape index: {1}]
  %6 = xla_tuple %s4, %s5
  %s7 = sld [smem:[#allocation0]]
  $region65: #{tpu_custom_call.1} parent=0
    _
  %s9 = ssub.s32 1, %s7
  %s10 = scalar_select 0, %s9, %s7
  $region1: #{tpu_custom_call.1} parent=0
    #allocation2 [shape = 'u8[4096]{0}', space=vmem, size = 0x1000, scoped, tag = 'input window, operand 0']
    #allocation3 [shape = 's32[2]{0}', space=sflag, size = 0x8, scoped, tag = 'scoped memory for tpu_custom_call.1']
    #allocation4 [shape = 's32[2]{0}', space=sflag, size = 0x8, scoped, tag = 'scoped memory for tpu_custom_call.1']
    #allocation5 [shape = 'u8[8192]{0}', space=vmem, size = 0x2000, scoped, tag = 'input window, operand 2, single buffered']
    #allocation6 [shape = 's32[1]{0}', space=sflag, size = 0x4, scoped, tag = 'scoped memory for tpu_custom_call.1']
    #allocation7 [shape = 'u8[8192]{0}', space=vmem, size = 0x2000, scoped, tag = 'output window, operand 0']
    #allocation8 [shape = 'u8[16384]{0}', space=vmem, size = 0x4000, scoped, tag = 'output window, operand 1']
    #allocation9 [shape = 's32[2]{0}', space=sflag, size = 0x8, scoped, tag = 'scoped memory for tpu_custom_call.1']
    %11 = vsyncpa [#allocation3], 0
    %s12 = scalar_lea.sflag [#allocation3], 1
    %13 = vsyncpa %s12, 0
    %14 = vsyncpa [#allocation6], 0
    %15 = vsyncpa [#allocation4], 0
    %s16 = scalar_lea.sflag [#allocation4], 1
    %17 = vsyncpa %s16, 0
    %18 = vsyncpa [#allocation9], 0
    %s19 = scalar_lea.sflag [#allocation9], 1
    %20 = vsyncpa %s19, 0
    loop: start=0, step=1, limit=4
    $region2: #{tpu_custom_call.1} parent=1 // loop_pre_header
      _
    $region3: #{tpu_custom_call.1} parent=1 // loop_header
      %s22 = sphi 0, %s26
      %p23 = scmp.ge.s32.totalorder %s22, 4
      %s29 = sphi 0, %s41
      %s30 = sphi 0, %s37
      %s31 = sphi 0, %s29
      %s32 = sphi 0, %s30
      %s33 = sphi 0, %s31
      %s34 = sphi 0, %s32
      %s44 = sphi 0, %s46
      %s47 = sphi 0, %s44
      %s48 = sphi 0, %s47
      %s64 = sphi 0, %s48
      %s70 = sphi 0, %s72
      %s73 = sphi 0, %s70
      %s74 = sphi 0, %s73
      %s90 = sphi 0, %s74
      %s96 = sphi 0, %s98
      %s99 = sphi 0, %s96
      %s100 = sphi 0, %s99
      %s116 = sphi 0, %s100
      %s122 = sphi 0, %s124
      %s125 = sphi 0, %s122
      %s126 = sphi 0, %s125
      %s142 = sphi 0, %s126
      %s150 = sphi 0, %s152
      %s153 = sphi 0, %s150
      %s154 = sphi 0, %s153
      %s170 = sphi 0, %s154
      %s178 = sphi 0, %s180
      %s181 = sphi 0, %s178
      %s182 = sphi 0, %s181
      %s198 = sphi 0, %s182
    $region4: #{tpu_custom_call.1} parent=1 // loop_header_branch
      %25 = sbr.rel (%p23) target = $region8
    $region5: #{tpu_custom_call.1} parent=1 // loop_body
      %s27 = ssub.s32 %s22, 1
      %s28 = ssub.s32 %s22, 2
      %s35 = sadd.s32 1, %s30
      %p36 = scmp.ge.s32.totalorder %s35, 2
      %s37 = scalar_select %p36, 0, %s35
      %s38 = sadd.s32 1, %s29
      %s39 = scalar_select %p36, %s38, %s29
      %p40 = scmp.ge.s32.totalorder %s39, 1
      %s41 = scalar_select %p40, 0, %s39
      %s42 = ssub.s32 %s30, %s37
      %p43 = scmp.eq.s32.totalorder %s42, 0
      %s45 = sadd.s32 %s44, 1
      %s46 = scalar_select %p43, %s44, %s45
      %p49 = pneg %p43
      %p50 = scmp.eq.s32.totalorder %s22, 1
      %p51 = por %p49, %p50
      %p52 = scmp.ne.s32.totalorder %s44, %s47
      %p53 = scmp.eq.s32.totalorder %s22, 0
      %p54 = por %p52, %p53
      %p55 = scmp.ne.s32.totalorder %s44, %s47
      %p56 = scmp.eq.s32.totalorder %s27, 1
      %p57 = por %p55, %p56
      %p58 = scmp.ne.s32.totalorder %s47, %s48
      %p59 = scmp.eq.s32.totalorder %s27, 0
      %p60 = por %p58, %p59
      %p61 = scmp.ne.s32.totalorder %s47, %s48
      %p62 = scmp.eq.s32.totalorder %s28, 1
      %p63 = por %p61, %p62
      %p65 = scmp.ne.s32.totalorder %s48, %s64
      %p66 = scmp.eq.s32.totalorder %s28, 0
      %p67 = por %p65, %p66
      %s68 = ssub.s32 %s30, %s37
      %p69 = scmp.eq.s32.totalorder %s68, 0
      %s71 = sadd.s32 %s70, 1
      %s72 = scalar_select %p69, %s70, %s71
      %p75 = pneg %p69
      %p76 = scmp.eq.s32.totalorder %s22, 1
      %p77 = por %p75, %p76
      %p78 = scmp.ne.s32.totalorder %s70, %s73
      %p79 = scmp.eq.s32.totalorder %s22, 0
      %p80 = por %p78, %p79
      %p81 = scmp.ne.s32.totalorder %s70, %s73
      %p82 = scmp.eq.s32.totalorder %s27, 1
      %p83 = por %p81, %p82
      %p84 = scmp.ne.s32.totalorder %s73, %s74
      %p85 = scmp.eq.s32.totalorder %s27, 0
      %p86 = por %p84, %p85
      %p87 = scmp.ne.s32.totalorder %s73, %s74
      %p88 = scmp.eq.s32.totalorder %s28, 1
      %p89 = por %p87, %p88
      %p91 = scmp.ne.s32.totalorder %s74, %s90
      %p92 = scmp.eq.s32.totalorder %s28, 0
      %p93 = por %p91, %p92
      %s94 = ssub.s32 %s29, %s41
      %p95 = scmp.eq.s32.totalorder %s94, 0
      %s97 = sadd.s32 %s96, 1
      %s98 = scalar_select %p95, %s96, %s97
      %p101 = pneg %p95
      %p102 = scmp.eq.s32.totalorder %s22, 1
      %p103 = por %p101, %p102
      %p104 = scmp.ne.s32.totalorder %s96, %s99
      %p105 = scmp.eq.s32.totalorder %s22, 0
      %p106 = por %p104, %p105
      %p107 = scmp.ne.s32.totalorder %s96, %s99
      %p108 = scmp.eq.s32.totalorder %s27, 1
      %p109 = por %p107, %p108
      %p110 = scmp.ne.s32.totalorder %s99, %s100
      %p111 = scmp.eq.s32.totalorder %s27, 0
      %p112 = por %p110, %p111
      %p113 = scmp.ne.s32.totalorder %s99, %s100
      %p114 = scmp.eq.s32.totalorder %s28, 1
      %p115 = por %p113, %p114
      %p117 = scmp.ne.s32.totalorder %s100, %s116
      %p118 = scmp.eq.s32.totalorder %s28, 0
      %p119 = por %p117, %p118
      %s120 = ssub.s32 %s29, %s41
      %p121 = scmp.eq.s32.totalorder %s120, 0
      %s123 = sadd.s32 %s122, 1
      %s124 = scalar_select %p121, %s122, %s123
      %p127 = pneg %p121
      %p128 = scmp.eq.s32.totalorder %s22, 1
      %p129 = por %p127, %p128
      %p130 = scmp.ne.s32.totalorder %s122, %s125
      %p131 = scmp.eq.s32.totalorder %s22, 0
      %p132 = por %p130, %p131
      %p133 = scmp.ne.s32.totalorder %s122, %s125
      %p134 = scmp.eq.s32.totalorder %s27, 1
      %p135 = por %p133, %p134
      %p136 = scmp.ne.s32.totalorder %s125, %s126
      %p137 = scmp.eq.s32.totalorder %s27, 0
      %p138 = por %p136, %p137
      %p139 = scmp.ne.s32.totalorder %s125, %s126
      %p140 = scmp.eq.s32.totalorder %s28, 1
      %p141 = por %p139, %p140
      %p143 = scmp.ne.s32.totalorder %s126, %s142
      %p144 = scmp.eq.s32.totalorder %s28, 0
      %p145 = por %p143, %p144
      %s146 = ssub.s32 %s30, %s37
      %s147 = ssub.s32 %s29, %s41
      %s148 = sor.u32 %s146, %s147
      %p149 = scmp.eq.s32.totalorder %s148, 0
      %s151 = sadd.s32 %s150, 1
      %s152 = scalar_select %p149, %s150, %s151
      %p155 = pneg %p149
      %p156 = scmp.eq.s32.totalorder %s22, 1
      %p157 = por %p155, %p156
      %p158 = scmp.ne.s32.totalorder %s150, %s153
      %p159 = scmp.eq.s32.totalorder %s22, 0
      %p160 = por %p158, %p159
      %p161 = scmp.ne.s32.totalorder %s150, %s153
      %p162 = scmp.eq.s32.totalorder %s27, 1
      %p163 = por %p161, %p162
      %p164 = scmp.ne.s32.totalorder %s153, %s154
      %p165 = scmp.eq.s32.totalorder %s27, 0
      %p166 = por %p164, %p165
      %p167 = scmp.ne.s32.totalorder %s153, %s154
      %p168 = scmp.eq.s32.totalorder %s28, 1
      %p169 = por %p167, %p168
      %p171 = scmp.ne.s32.totalorder %s154, %s170
      %p172 = scmp.eq.s32.totalorder %s28, 0
      %p173 = por %p171, %p172
      %s174 = ssub.s32 %s30, %s37
      %s175 = ssub.s32 %s29, %s41
      %s176 = sor.u32 %s174, %s175
      %p177 = scmp.eq.s32.totalorder %s176, 0
      %s179 = sadd.s32 %s178, 1
      %s180 = scalar_select %p177, %s178, %s179
      %p183 = pneg %p177
      %p184 = scmp.eq.s32.totalorder %s22, 1
      %p185 = por %p183, %p184
      %p186 = scmp.ne.s32.totalorder %s178, %s181
      %p187 = scmp.eq.s32.totalorder %s22, 0
      %p188 = por %p186, %p187
      %p189 = scmp.ne.s32.totalorder %s178, %s181
      %p190 = scmp.eq.s32.totalorder %s27, 1
      %p191 = por %p189, %p190
      %p192 = scmp.ne.s32.totalorder %s181, %s182
      %p193 = scmp.eq.s32.totalorder %s27, 0
      %p194 = por %p192, %p193
      %p195 = scmp.ne.s32.totalorder %s181, %s182
      %p196 = scmp.eq.s32.totalorder %s28, 1
      %p197 = por %p195, %p196
      %p199 = scmp.ne.s32.totalorder %s182, %s198
      %p200 = scmp.eq.s32.totalorder %s28, 0
      %p201 = por %p199, %p200
      %p202 = scmp.le.s32.totalorder 1, %s22
      %p203 = scmp.lt.s32.totalorder %s22, 3
      %p204 = pnand %p202, %p203
      %p205 = pneg %p204
      // Predicated region
      $region9: #{tpu_custom_call.1} parent=5 // pred_check
        _
      $region10: #{tpu_custom_call.1} parent=5 // pred_check_branch
        %207 = sbr.rel (%p204) target = $region12
      $region11: #{tpu_custom_call.1} parent=5 // pred_region
        %s208 = ssub.s32 %s22, 1
        // Predicated region
        $region13: #{tpu_custom_call.1} parent=11 // pred_check
          %p209 = pneg %p112
        $region14: #{tpu_custom_call.1} parent=11 // pred_check_branch
          %211 = sbr.rel (%p209) target = $region16
        $region15: #{tpu_custom_call.1} parent=11 // pred_region
          %s213 = ssub.s32 256, 256
          %214 = vsyncadd [#allocation6], %s213
          %s215 = smul.addr %s31, 4
          %s216 = smul.addr %s215, 64
          %s217 = scalar_lea.hbm %s2, %s216
          %s218 = sshll.u32 [#allocation5], 4
          %s219 = int_to_ptr.vmem [resolvable:$true] %s218
          %224 = dma.hbm_to_vmem [thread:$0]  %s217, 256, %s219, [#allocation6], 64, 64, 4
        $region16: #{tpu_custom_call.1} parent=11 // pred_fallthru
          _
        // Predicated region
        $region17: #{tpu_custom_call.1} parent=11 // pred_check
          %p225 = pneg %p138
        $region18: #{tpu_custom_call.1} parent=11 // pred_check_branch
          %227 = sbr.rel (%p225) target = $region20
        $region19: #{tpu_custom_call.1} parent=11 // pred_region
          %p228 = scmp.lt.s32.totalorder %s31, 0
          %s229 = scalar_select %p228, %s31, 0
          %s230 = scalar_lea.vmem %s3, %s229
        $region20: #{tpu_custom_call.1} parent=11 // pred_fallthru
          _
      $region12: #{tpu_custom_call.1} parent=5 // pred_fallthru
        _
      %p231 = scmp.lt.s32.totalorder %s22, 2
      // Predicated region
      $region21: #{tpu_custom_call.1} parent=5 // pred_check
        %p232 = pneg %p231
      $region22: #{tpu_custom_call.1} parent=5 // pred_check_branch
        %234 = sbr.rel (%p232) target = $region24
      $region23: #{tpu_custom_call.1} parent=5 // pred_region
        // Predicated region
        $region25: #{tpu_custom_call.1} parent=23 // pred_check
          %p235 = pneg %p54
        $region26: #{tpu_custom_call.1} parent=23 // pred_check_branch
          %237 = sbr.rel (%p235) target = $region28
        $region27: #{tpu_custom_call.1} parent=23 // pred_region
          %s238 = sand.u32 %s44, 1
          %s239 = scalar_lea.sflag [#allocation3], %s238
          %s240 = sand.u32 %s44, 1
          %s241 = smul.addr %s240, 4
          %s242 = scalar_lea.vmem [#allocation2], %s241
          %s244 = ssub.s32 64, 64
          %245 = vsyncadd %s239, %s244
          %s246 = smul.addr %s30, 64
          %s247 = scalar_lea.hbm %s0, %s246
          %s249 = sshll.u32 %s242, 4
          %s250 = int_to_ptr.vmem [resolvable:$true] %s249
          %252 = dma.hbm_to_vmem [thread:$0]  %s247, 64, %s250, %s239
        $region28: #{tpu_custom_call.1} parent=23 // pred_fallthru
          _
        // Predicated region
        $region29: #{tpu_custom_call.1} parent=23 // pred_check
          %p253 = pneg %p80
        $region30: #{tpu_custom_call.1} parent=23 // pred_check_branch
          %255 = sbr.rel (%p253) target = $region32
        $region31: #{tpu_custom_call.1} parent=23 // pred_region
          %p256 = scmp.lt.s32.totalorder %s30, 1
          %s257 = scalar_select %p256, %s30, 1
          %s258 = scalar_lea.vmem %s1, %s257
        $region32: #{tpu_custom_call.1} parent=23 // pred_fallthru
          _
      $region24: #{tpu_custom_call.1} parent=5 // pred_fallthru
        _
      %p259 = scmp.le.s32.totalorder 1, %s22
      %p260 = scmp.lt.s32.totalorder %s22, 3
      %p261 = pnand %p259, %p260
      %p262 = pneg %p261
      // Predicated region
      $region33: #{tpu_custom_call.1} parent=5 // pred_check
        _
      $region34: #{tpu_custom_call.1} parent=5 // pred_check_branch
        %264 = sbr.rel (%p261) target = $region36
      $region35: #{tpu_custom_call.1} parent=5 // pred_region
        %s265 = ssub.s32 %s22, 1
        %s266 = sand.u32 %s47, 1
        %s267 = scalar_lea.sflag [#allocation3], %s266
        %s268 = sand.u32 %s47, 1
        %s269 = smul.addr %s268, 4
        %s270 = scalar_lea.vmem [#allocation2], %s269
        // Predicated region
        $region37: #{tpu_custom_call.1} parent=35 // pred_check
          %p271 = pneg %p60
        $region38: #{tpu_custom_call.1} parent=35 // pred_check_branch
          %273 = sbr.rel (%p271) target = $region40
        $region39: #{tpu_custom_call.1} parent=35 // pred_region
          %274 = dma.done %s267, 64
        $region40: #{tpu_custom_call.1} parent=35 // pred_fallthru
          _
        // Predicated region
        $region41: #{tpu_custom_call.1} parent=35 // pred_check
          %p275 = pneg %p112
        $region42: #{tpu_custom_call.1} parent=35 // pred_check_branch
          %277 = sbr.rel (%p275) target = $region44
        $region43: #{tpu_custom_call.1} parent=35 // pred_region
          %278 = dma.done [#allocation6], 256
        $region44: #{tpu_custom_call.1} parent=35 // pred_fallthru
          _
        %s279 = sand.u32 %s47, 1
        %s280 = scalar_lea.sflag [#allocation3], %s279
        %s281 = sand.u32 %s47, 1
        %s282 = smul.addr %s281, 4
        %s283 = scalar_lea.vmem [#allocation2], %s282
        %p284 = pneg %p60
        %p285 = pneg %p57
        %p286 = scmp.lt.s32.totalorder %s32, 1
        %s287 = scalar_select %p286, %s32, 1
        %s288 = scalar_lea.vmem %s1, %s287
        %p289 = pneg %p86
        %p290 = pneg %p83
        %p291 = pneg %p112
        %p292 = pneg %p109
        %p293 = scmp.lt.s32.totalorder %s31, 0
        %s294 = scalar_select %p293, %s31, 0
        %s295 = scalar_lea.vmem %s3, %s294
        %p296 = pneg %p138
        %p297 = pneg %p135
        %p298 = pneg %p166
        %p299 = pneg %p163
        %s300 = sand.u32 %s153, 1
        %s301 = scalar_lea.sflag [#allocation4], %s300
        %s302 = sand.u32 %s153, 1
        %s303 = smul.addr %s302, 8
        %s304 = scalar_lea.vmem [#allocation7], %s303
        %p305 = pneg %p194
        %p306 = pneg %p191
        %s307 = sand.u32 %s181, 1
        %s308 = scalar_lea.sflag [#allocation9], %s307
        %s309 = sand.u32 %s181, 1
        %s310 = smul.addr %s309, 16
        %s311 = scalar_lea.vmem [#allocation8], %s310
        %p312 = scmp.lt.s32.totalorder %s32, 1
        %s313 = scalar_select %p312, %s32, 1
        %s314 = scalar_lea.vmem %s1, %s313
        %p315 = scmp.lt.s32.totalorder %s31, 0
        %s316 = scalar_select %p315, %s31, 0
        %s317 = scalar_lea.vmem %s3, %s316
        %s318 = smul.u32 4, %s31
        %v320 = vld [vmem:[%s270] sm:$0xf]
        %v321 = vld [vmem:[#allocation5] sm:$0xf]
        %v322 = vld [vmem:[#allocation5 + $0x4] sm:$0xf]
        %v323 = vld [vmem:[#allocation5 + $0x8] sm:$0xf]
        %v324 = vld [vmem:[#allocation5 + $0xc] sm:$0xf]
        %v325 = vld [vmem:[%s317] sm:$0x1]
        %v327 = vlaneseq
        %v328 = vshrl.u32 %v327, 7
        %v329 = vsub.s32 0, %v328
        %v330 = vrot.slane %v325, %v329
        %v336 = vunpack.c.l.b16 %v321
        %v337 = vunpack.c.l.b16 %v322
        %v338 = vunpack.c.l.b16 %v323
        %v339 = vunpack.c.l.b16 %v324
        %v340 = vpack.c.b16 %v337, %v336
        %v341 = vpack.c.b16 %v339, %v338
        %vm344 = vcmask 261120
        %v346 = vsel %vm344, %v320, 0
        %348 = vmatprep.subr.bf16.mxu0 0
        %349 = vmatpush1.bf16.msra.mxu0 %v340
        %350 = vmatprep.subr.bf16.mxu0 0
        %351 = vmatpush1.bf16.msra.mxu0 %v341
        %352 = vmatprep.subr.bf16.mxu0 0
        %353 = vmatpush1.bf16.msra.mxu0 0
        %354 = vmatprep.subr.bf16.mxu0 0
        %355 = vmatpush1.bf16.msra.mxu0 0
        %356 = vmatprep.subr.bf16.mxu0 0
        %357 = vmatpush1.bf16.msra.mxu0 0
        %358 = vmatprep.subr.bf16.mxu0 0
        %359 = vmatpush1.bf16.msra.mxu0 0
        %360 = vmatprep.subr.bf16.mxu0 0
        %361 = vmatpush1.bf16.msra.mxu0 0
        %362 = vmatprep.subr.bf16.mxu0 0
        %363 = vmatpush1.bf16.msra.mxu0 0
        %364 = vmatprep.subr.bf16.mxu0 0
        %365 = vmatpush1.bf16.msra.mxu0 0
        %366 = vmatprep.subr.bf16.mxu0 0
        %367 = vmatpush1.bf16.msra.mxu0 0
        %368 = vmatprep.subr.bf16.mxu0 0
        %369 = vmatpush1.bf16.msra.mxu0 0
        %370 = vmatprep.subr.bf16.mxu0 0
        %371 = vmatpush1.bf16.msra.mxu0 0
        %372 = vmatprep.subr.bf16.mxu0 0
        %373 = vmatpush1.bf16.msra.mxu0 0
        %374 = vmatprep.subr.bf16.mxu0 0
        %375 = vmatpush1.bf16.msra.mxu0 0
        %376 = vmatprep.subr.bf16.mxu0 0
        %377 = vmatpush1.bf16.msra.mxu0 0
        %378 = vmatprep.subr.bf16.mxu0 0
        %379 = vmatpush1.bf16.msra.mxu0 0
        %380 = vmatprep.mubr.bf16.mxu0 0
        %381 = vmatmul.mubr.bf16.gmra.mrb[0].mxu0 %v346
        %v382 = vpop.f32.mrb[0].mxu0
        %v383 = vadd.f32 %v330, %v382
        %v384 = vpop.f32.mrb[0].mxu0
        %v385 = vpop.f32.mrb[0].mxu0
        %v386 = vpop.f32.mrb[0].mxu0
        %387 = vdwg.mxu0
        %v388 = vpack.c.bf16 %v383, %v383
        %v389 = vld [vmem:[%s314] sm:$0x1]
        %v391 = vlaneseq
        %v392 = vshrl.u32 %v391, 7
        %v393 = vsub.s32 0, %v392
        %v394 = vrot.slane %v389, %v393
        %397 = vrot.lane.b32.xlu0 %v388, 96
        %v398 = vpop.permute.xlu0 %397
        %vm399 = vcmask 64512
        %v401 = vsel %vm399, %v388, 0
        %v404 = vsel %vm399, %v398, 0
        %406 = vmatprep.subr.bf16.mxu0 0
        %407 = vmatpush1.bf16.xpose.msra.mxu0 %v404
        %408 = vmatprep.subr.bf16.mxu0 0
        %409 = vmatpush1.bf16.xpose.msra.mxu0 0
        %410 = vmatprep.subr.bf16.mxu0 0
        %411 = vmatpush1.bf16.xpose.msra.mxu0 0
        %412 = vmatprep.subr.bf16.mxu0 0
        %413 = vmatpush1.bf16.xpose.msra.mxu0 0
        %414 = vmatprep.subr.bf16.mxu0 0
        %415 = vmatpush1.bf16.xpose.msra.mxu0 0
        %416 = vmatprep.subr.bf16.mxu0 0
        %417 = vmatpush1.bf16.xpose.msra.mxu0 0
        %418 = vmatprep.subr.bf16.mxu0 0
        %419 = vmatpush1.bf16.xpose.msra.mxu0 0
        %420 = vmatprep.subr.bf16.mxu0 0
        %421 = vmatpush1.bf16.xpose.msra.mxu0 0
        %422 = vmatprep.subr.bf16.mxu0 0
        %423 = vmatpush1.bf16.xpose.msra.mxu0 0
        %424 = vmatprep.subr.bf16.mxu0 0
        %425 = vmatpush1.bf16.xpose.msra.mxu0 0
        %426 = vmatprep.subr.bf16.mxu0 0
        %427 = vmatpush1.bf16.xpose.msra.mxu0 0
        %428 = vmatprep.subr.bf16.mxu0 0
        %429 = vmatpush1.bf16.xpose.msra.mxu0 0
        %430 = vmatprep.subr.bf16.mxu0 0
        %431 = vmatpush1.bf16.xpose.msra.mxu0 0
        %432 = vmatprep.subr.bf16.mxu0 0
        %433 = vmatpush1.bf16.xpose.msra.mxu0 0
        %434 = vmatprep.subr.bf16.mxu0 0
        %435 = vmatpush1.bf16.xpose.msra.mxu0 0
        %436 = vmatprep.subr.bf16.mxu0 0
        %437 = vmatpush1.bf16.xpose.msra.mxu0 0
        %438 = vmatprep.mubr.bf16.mxu0 0
        %439 = vmatmul.mubr.bf16.gmra.mrb[0].mxu0 %v401
        %v440 = vpop.f32.mrb[0].mxu0
        %v441 = vadd.f32 %v394, %v440
        %v442 = vpop.f32.mrb[0].mxu0
        %v443 = vpop.f32.mrb[0].mxu0
        %v444 = vpop.f32.mrb[0].mxu0
        %445 = vdwg.mxu0
        %v446 = vsel %vm399, %v441, -inf
        %447 = vmax.xlane.f32.xlu0 %v446
        %v448 = vpop.xlane.xlu0 %447
        %v449 = vsub.f32 %v441, %v448
        %v450 = vmul.f32 %v449, 1.442695
        %v451 = vpow.pop %v450
        %v452 = vsel %vm399, %v451, 0.0
        %453 = vadd.xlane.f32.xlu0 %v452
        %v454 = vpop.xlane.xlu0 %453
        %v455 = vrcp.pop %v454
        %v456 = vmul.f32 %v451, %v455
        %v457 = vpack.c.bf16 %v456, %v456
        %vm458 = vcmask 60416
        %459 = vst.msk [vmem:[%s311] sm:$0xf] %vm458, %v457
        %460 = vrot.lane.b32.xlu0 %v388, 64
        %v461 = vpop.permute.xlu0 %460
        %v463 = vsel %vm399, %v457, 0
        %vm465 = vcmask 1043456
        %v467 = vsel %vm465, %v461, 0
        %469 = vmatprep.subr.bf16.mxu0 0
        %470 = vmatpush1.bf16.msra.mxu0 %v467
        %471 = vmatprep.subr.bf16.mxu0 0
        %472 = vmatpush1.bf16.msra.mxu0 0
        %473 = vmatprep.subr.bf16.mxu0 0
        %474 = vmatpush1.bf16.msra.mxu0 0
        %475 = vmatprep.subr.bf16.mxu0 0
        %476 = vmatpush1.bf16.msra.mxu0 0
        %477 = vmatprep.subr.bf16.mxu0 0
        %478 = vmatpush1.bf16.msra.mxu0 0
        %479 = vmatprep.subr.bf16.mxu0 0
        %480 = vmatpush1.bf16.msra.mxu0 0
        %481 = vmatprep.subr.bf16.mxu0 0
        %482 = vmatpush1.bf16.msra.mxu0 0
        %483 = vmatprep.subr.bf16.mxu0 0
        %484 = vmatpush1.bf16.msra.mxu0 0
        %485 = vmatprep.subr.bf16.mxu0 0
        %486 = vmatpush1.bf16.msra.mxu0 0
        %487 = vmatprep.subr.bf16.mxu0 0
        %488 = vmatpush1.bf16.msra.mxu0 0
        %489 = vmatprep.subr.bf16.mxu0 0
        %490 = vmatpush1.bf16.msra.mxu0 0
        %491 = vmatprep.subr.bf16.mxu0 0
        %492 = vmatpush1.bf16.msra.mxu0 0
        %493 = vmatprep.subr.bf16.mxu0 0
        %494 = vmatpush1.bf16.msra.mxu0 0
        %495 = vmatprep.subr.bf16.mxu0 0
        %496 = vmatpush1.bf16.msra.mxu0 0
        %497 = vmatprep.subr.bf16.mxu0 0
        %498 = vmatpush1.bf16.msra.mxu0 0
        %499 = vmatprep.subr.bf16.mxu0 0
        %500 = vmatpush1.bf16.msra.mxu0 0
        %501 = vmatprep.mubr.bf16.mxu0 0
        %502 = vmatmul.mubr.bf16.gmra.mrb[0].mxu0 %v463
        %v503 = vpop.f32.mrb[0].mxu0
        %v504 = vadd.f32 0.0, %v503
        %v505 = vpop.f32.mrb[0].mxu0
        %v506 = vpop.f32.mrb[0].mxu0
        %v507 = vpop.f32.mrb[0].mxu0
        %508 = vdwg.mxu0
        %509 = vst.msk [vmem:[%s304] sm:$0xff] %vm399, %v504
        %510 = vrot.lane.b32.xlu0 %v388, 120
        %v511 = vpop.permute.xlu0 %510
        %512 = vrot.lane.b32.xlu0 %v388, 88
        %v513 = vpop.permute.xlu0 %512
        %v515 = vsel %vm399, %v511, 0
        %v518 = vsel %vm399, %v513, 0
        %520 = vmatprep.subr.bf16.mxu0 0
        %521 = vmatpush1.bf16.xpose.msra.mxu0 %v518
        %522 = vmatprep.subr.bf16.mxu0 0
        %523 = vmatpush1.bf16.xpose.msra.mxu0 0
        %524 = vmatprep.subr.bf16.mxu0 0
        %525 = vmatpush1.bf16.xpose.msra.mxu0 0
        %526 = vmatprep.subr.bf16.mxu0 0
        %527 = vmatpush1.bf16.xpose.msra.mxu0 0
        %528 = vmatprep.subr.bf16.mxu0 0
        %529 = vmatpush1.bf16.xpose.msra.mxu0 0
        %530 = vmatprep.subr.bf16.mxu0 0
        %531 = vmatpush1.bf16.xpose.msra.mxu0 0
        %532 = vmatprep.subr.bf16.mxu0 0
        %533 = vmatpush1.bf16.xpose.msra.mxu0 0
        %534 = vmatprep.subr.bf16.mxu0 0
        %535 = vmatpush1.bf16.xpose.msra.mxu0 0
        %536 = vmatprep.subr.bf16.mxu0 0
        %537 = vmatpush1.bf16.xpose.msra.mxu0 0
        %538 = vmatprep.subr.bf16.mxu0 0
        %539 = vmatpush1.bf16.xpose.msra.mxu0 0
        %540 = vmatprep.subr.bf16.mxu0 0
        %541 = vmatpush1.bf16.xpose.msra.mxu0 0
        %542 = vmatprep.subr.bf16.mxu0 0
        %543 = vmatpush1.bf16.xpose.msra.mxu0 0
        %544 = vmatprep.subr.bf16.mxu0 0
        %545 = vmatpush1.bf16.xpose.msra.mxu0 0
        %546 = vmatprep.subr.bf16.mxu0 0
        %547 = vmatpush1.bf16.xpose.msra.mxu0 0
        %548 = vmatprep.subr.bf16.mxu0 0
        %549 = vmatpush1.bf16.xpose.msra.mxu0 0
        %550 = vmatprep.subr.bf16.mxu0 0
        %551 = vmatpush1.bf16.xpose.msra.mxu0 0
        %552 = vmatprep.mubr.bf16.mxu0 0
        %553 = vmatmul.mubr.bf16.gmra.mrb[0].mxu0 %v515
        %v554 = vpop.f32.mrb[0].mxu0
        %v555 = vadd.f32 %v394, %v554
        %v556 = vpop.f32.mrb[0].mxu0
        %v557 = vpop.f32.mrb[0].mxu0
        %v558 = vpop.f32.mrb[0].mxu0
        %559 = vdwg.mxu0
        %v560 = vsel %vm399, %v555, -inf
        %561 = vmax.xlane.f32.xlu0 %v560
        %v562 = vpop.xlane.xlu0 %561
        %v563 = vsub.f32 %v555, %v562
        %v564 = vmul.f32 %v563, 1.442695
        %v565 = vpow.pop %v564
        %v566 = vsel %vm399, %v565, 0.0
        %567 = vadd.xlane.f32.xlu0 %v566
        %v568 = vpop.xlane.xlu0 %567
        %v569 = vrcp.pop %v568
        %v570 = vmul.f32 %v565, %v569
        %v571 = vpack.c.bf16 %v570, %v570
        %s572 = scalar_lea.vmem %s311, 4 [#allocation8]
        %573 = vst.msk [vmem:[%s572] sm:$0xf] %vm458, %v571
        %574 = vrot.lane.b32.xlu0 %v388, 56
        %v575 = vpop.permute.xlu0 %574
        %v577 = vsel %vm399, %v571, 0
        %v580 = vsel %vm465, %v575, 0
        %582 = vmatprep.subr.bf16.mxu0 0
        %583 = vmatpush1.bf16.msra.mxu0 %v580
        %584 = vmatprep.subr.bf16.mxu0 0
        %585 = vmatpush1.bf16.msra.mxu0 0
        %586 = vmatprep.subr.bf16.mxu0 0
        %587 = vmatpush1.bf16.msra.mxu0 0
        %588 = vmatprep.subr.bf16.mxu0 0
        %589 = vmatpush1.bf16.msra.mxu0 0
        %590 = vmatprep.subr.bf16.mxu0 0
        %591 = vmatpush1.bf16.msra.mxu0 0
        %592 = vmatprep.subr.bf16.mxu0 0
        %593 = vmatpush1.bf16.msra.mxu0 0
        %594 = vmatprep.subr.bf16.mxu0 0
        %595 = vmatpush1.bf16.msra.mxu0 0
        %596 = vmatprep.subr.bf16.mxu0 0
        %597 = vmatpush1.bf16.msra.mxu0 0
        %598 = vmatprep.subr.bf16.mxu0 0
        %599 = vmatpush1.bf16.msra.mxu0 0
        %600 = vmatprep.subr.bf16.mxu0 0
        %601 = vmatpush1.bf16.msra.mxu0 0
        %602 = vmatprep.subr.bf16.mxu0 0
        %603 = vmatpush1.bf16.msra.mxu0 0
        %604 = vmatprep.subr.bf16.mxu0 0
        %605 = vmatpush1.bf16.msra.mxu0 0
        %606 = vmatprep.subr.bf16.mxu0 0
        %607 = vmatpush1.bf16.msra.mxu0 0
        %608 = vmatprep.subr.bf16.mxu0 0
        %609 = vmatpush1.bf16.msra.mxu0 0
        %610 = vmatprep.subr.bf16.mxu0 0
        %611 = vmatpush1.bf16.msra.mxu0 0
        %612 = vmatprep.subr.bf16.mxu0 0
        %613 = vmatpush1.bf16.msra.mxu0 0
        %614 = vmatprep.mubr.bf16.mxu0 0
        %615 = vmatmul.mubr.bf16.gmra.mrb[0].mxu0 %v577
        %v616 = vpop.f32.mrb[0].mxu0
        %v617 = vadd.f32 0.0, %v616
        %v618 = vpop.f32.mrb[0].mxu0
        %v619 = vpop.f32.mrb[0].mxu0
        %v620 = vpop.f32.mrb[0].mxu0
        %621 = vdwg.mxu0
        %623 = vrot.lane.b32.xlu0 %v617, 8
        %v624 = vpop.permute.xlu0 %623
        %vm626 = vcmask 130112
        %627 = vst.msk [vmem:[%s304] sm:$0xff] %vm626, %v624
        %628 = vrot.lane.b32.xlu0 %v388, 112
        %v629 = vpop.permute.xlu0 %628
        %630 = vrot.lane.b32.xlu0 %v388, 80
        %v631 = vpop.permute.xlu0 %630
        %v633 = vsel %vm399, %v629, 0
        %v636 = vsel %vm399, %v631, 0
        %638 = vmatprep.subr.bf16.mxu0 0
        %639 = vmatpush1.bf16.xpose.msra.mxu0 %v636
        %640 = vmatprep.subr.bf16.mxu0 0
        %641 = vmatpush1.bf16.xpose.msra.mxu0 0
        %642 = vmatprep.subr.bf16.mxu0 0
        %643 = vmatpush1.bf16.xpose.msra.mxu0 0
        %644 = vmatprep.subr.bf16.mxu0 0
        %645 = vmatpush1.bf16.xpose.msra.mxu0 0
        %646 = vmatprep.subr.bf16.mxu0 0
        %647 = vmatpush1.bf16.xpose.msra.mxu0 0
        %648 = vmatprep.subr.bf16.mxu0 0
        %649 = vmatpush1.bf16.xpose.msra.mxu0 0
        %650 = vmatprep.subr.bf16.mxu0 0
        %651 = vmatpush1.bf16.xpose.msra.mxu0 0
        %652 = vmatprep.subr.bf16.mxu0 0
        %653 = vmatpush1.bf16.xpose.msra.mxu0 0
        %654 = vmatprep.subr.bf16.mxu0 0
        %655 = vmatpush1.bf16.xpose.msra.mxu0 0
        %656 = vmatprep.subr.bf16.mxu0 0
        %657 = vmatpush1.bf16.xpose.msra.mxu0 0
        %658 = vmatprep.subr.bf16.mxu0 0
        %659 = vmatpush1.bf16.xpose.msra.mxu0 0
        %660 = vmatprep.subr.bf16.mxu0 0
        %661 = vmatpush1.bf16.xpose.msra.mxu0 0
        %662 = vmatprep.subr.bf16.mxu0 0
        %663 = vmatpush1.bf16.xpose.msra.mxu0 0
        %664 = vmatprep.subr.bf16.mxu0 0
        %665 = vmatpush1.bf16.xpose.msra.mxu0 0
        %666 = vmatprep.subr.bf16.mxu0 0
        %667 = vmatpush1.bf16.xpose.msra.mxu0 0
        %668 = vmatprep.subr.bf16.mxu0 0
        %669 = vmatpush1.bf16.xpose.msra.mxu0 0
        %670 = vmatprep.mubr.bf16.mxu0 0
        %671 = vmatmul.mubr.bf16.gmra.mrb[0].mxu0 %v633
        %v672 = vpop.f32.mrb[0].mxu0
        %v673 = vadd.f32 %v394, %v672
        %v674 = vpop.f32.mrb[0].mxu0
        %v675 = vpop.f32.mrb[0].mxu0
        %v676 = vpop.f32.mrb[0].mxu0
        %677 = vdwg.mxu0
        %v678 = vsel %vm399, %v673, -inf
        %679 = vmax.xlane.f32.xlu0 %v678
        %v680 = vpop.xlane.xlu0 %679
        %v681 = vsub.f32 %v673, %v680
        %v682 = vmul.f32 %v681, 1.442695
        %v683 = vpow.pop %v682
        %v684 = vsel %vm399, %v683, 0.0
        %685 = vadd.xlane.f32.xlu0 %v684
        %v686 = vpop.xlane.xlu0 %685
        %v687 = vrcp.pop %v686
        %v688 = vmul.f32 %v683, %v687
        %v689 = vpack.c.bf16 %v688, %v688
        %s690 = scalar_lea.vmem %s311, 8 [#allocation8]
        %691 = vst.msk [vmem:[%s690] sm:$0xf] %vm458, %v689
        %692 = vrot.lane.b32.xlu0 %v388, 48
        %v693 = vpop.permute.xlu0 %692
        %v695 = vsel %vm399, %v689, 0
        %v698 = vsel %vm465, %v693, 0
        %700 = vmatprep.subr.bf16.mxu0 0
        %701 = vmatpush1.bf16.msra.mxu0 %v698
        %702 = vmatprep.subr.bf16.mxu0 0
        %703 = vmatpush1.bf16.msra.mxu0 0
        %704 = vmatprep.subr.bf16.mxu0 0
        %705 = vmatpush1.bf16.msra.mxu0 0
        %706 = vmatprep.subr.bf16.mxu0 0
        %707 = vmatpush1.bf16.msra.mxu0 0
        %708 = vmatprep.subr.bf16.mxu0 0
        %709 = vmatpush1.bf16.msra.mxu0 0
        %710 = vmatprep.subr.bf16.mxu0 0
        %711 = vmatpush1.bf16.msra.mxu0 0
        %712 = vmatprep.subr.bf16.mxu0 0
        %713 = vmatpush1.bf16.msra.mxu0 0
        %714 = vmatprep.subr.bf16.mxu0 0
        %715 = vmatpush1.bf16.msra.mxu0 0
        %716 = vmatprep.subr.bf16.mxu0 0
        %717 = vmatpush1.bf16.msra.mxu0 0
        %718 = vmatprep.subr.bf16.mxu0 0
        %719 = vmatpush1.bf16.msra.mxu0 0
        %720 = vmatprep.subr.bf16.mxu0 0
        %721 = vmatpush1.bf16.msra.mxu0 0
        %722 = vmatprep.subr.bf16.mxu0 0
        %723 = vmatpush1.bf16.msra.mxu0 0
        %724 = vmatprep.subr.bf16.mxu0 0
        %725 = vmatpush1.bf16.msra.mxu0 0
        %726 = vmatprep.subr.bf16.mxu0 0
        %727 = vmatpush1.bf16.msra.mxu0 0
        %728 = vmatprep.subr.bf16.mxu0 0
        %729 = vmatpush1.bf16.msra.mxu0 0
        %730 = vmatprep.subr.bf16.mxu0 0
        %731 = vmatpush1.bf16.msra.mxu0 0
        %732 = vmatprep.mubr.bf16.mxu0 0
        %733 = vmatmul.mubr.bf16.gmra.mrb[0].mxu0 %v695
        %v734 = vpop.f32.mrb[0].mxu0
        %v735 = vadd.f32 0.0, %v734
        %v736 = vpop.f32.mrb[0].mxu0
        %v737 = vpop.f32.mrb[0].mxu0
        %v738 = vpop.f32.mrb[0].mxu0
        %739 = vdwg.mxu0
        %741 = vrot.lane.b32.xlu0 %v735, 16
        %v742 = vpop.permute.xlu0 %741
        %vm744 = vcmask 195712
        %745 = vst.msk [vmem:[%s304] sm:$0xff] %vm744, %v742
        %746 = vrot.lane.b32.xlu0 %v388, 104
        %v747 = vpop.permute.xlu0 %746
        %748 = vrot.lane.b32.xlu0 %v388, 72
        %v749 = vpop.permute.xlu0 %748
        %v751 = vsel %vm399, %v747, 0
        %v754 = vsel %vm399, %v749, 0
        %756 = vmatprep.subr.bf16.mxu0 0
        %757 = vmatpush1.bf16.xpose.msra.mxu0 %v754
        %758 = vmatprep.subr.bf16.mxu0 0
        %759 = vmatpush1.bf16.xpose.msra.mxu0 0
        %760 = vmatprep.subr.bf16.mxu0 0
        %761 = vmatpush1.bf16.xpose.msra.mxu0 0
        %762 = vmatprep.subr.bf16.mxu0 0
        %763 = vmatpush1.bf16.xpose.msra.mxu0 0
        %764 = vmatprep.subr.bf16.mxu0 0
        %765 = vmatpush1.bf16.xpose.msra.mxu0 0
        %766 = vmatprep.subr.bf16.mxu0 0
        %767 = vmatpush1.bf16.xpose.msra.mxu0 0
        %768 = vmatprep.subr.bf16.mxu0 0
        %769 = vmatpush1.bf16.xpose.msra.mxu0 0
        %770 = vmatprep.subr.bf16.mxu0 0
        %771 = vmatpush1.bf16.xpose.msra.mxu0 0
        %772 = vmatprep.subr.bf16.mxu0 0
        %773 = vmatpush1.bf16.xpose.msra.mxu0 0
        %774 = vmatprep.subr.bf16.mxu0 0
        %775 = vmatpush1.bf16.xpose.msra.mxu0 0
        %776 = vmatprep.subr.bf16.mxu0 0
        %777 = vmatpush1.bf16.xpose.msra.mxu0 0
        %778 = vmatprep.subr.bf16.mxu0 0
        %779 = vmatpush1.bf16.xpose.msra.mxu0 0
        %780 = vmatprep.subr.bf16.mxu0 0
        %781 = vmatpush1.bf16.xpose.msra.mxu0 0
        %782 = vmatprep.subr.bf16.mxu0 0
        %783 = vmatpush1.bf16.xpose.msra.mxu0 0
        %784 = vmatprep.subr.bf16.mxu0 0
        %785 = vmatpush1.bf16.xpose.msra.mxu0 0
        %786 = vmatprep.subr.bf16.mxu0 0
        %787 = vmatpush1.bf16.xpose.msra.mxu0 0
        %788 = vmatprep.mubr.bf16.mxu0 0
        %789 = vmatmul.mubr.bf16.gmra.mrb[0].mxu0 %v751
        %v790 = vpop.f32.mrb[0].mxu0
        %v791 = vadd.f32 %v394, %v790
        %v792 = vpop.f32.mrb[0].mxu0
        %v793 = vpop.f32.mrb[0].mxu0
        %v794 = vpop.f32.mrb[0].mxu0
        %795 = vdwg.mxu0
        %v796 = vsel %vm399, %v791, -inf
        %797 = vmax.xlane.f32.xlu0 %v796
        %v798 = vpop.xlane.xlu0 %797
        %v799 = vsub.f32 %v791, %v798
        %v800 = vmul.f32 %v799, 1.442695
        %v801 = vpow.pop %v800
        %v802 = vsel %vm399, %v801, 0.0
        %803 = vadd.xlane.f32.xlu0 %v802
        %v804 = vpop.xlane.xlu0 %803
        %v805 = vrcp.pop %v804
        %v806 = vmul.f32 %v801, %v805
        %v807 = vpack.c.bf16 %v806, %v806
        %s808 = scalar_lea.vmem %s311, 12 [#allocation8]
        %809 = vst.msk [vmem:[%s808] sm:$0xf] %vm458, %v807
        %810 = vrot.lane.b32.xlu0 %v388, 40
        %v811 = vpop.permute.xlu0 %810
        %v813 = vsel %vm399, %v807, 0
        %v816 = vsel %vm465, %v811, 0
        %818 = vmatprep.subr.bf16.mxu0 0
        %819 = vmatpush1.bf16.msra.mxu0 %v816
        %820 = vmatprep.subr.bf16.mxu0 0
        %821 = vmatpush1.bf16.msra.mxu0 0
        %822 = vmatprep.subr.bf16.mxu0 0
        %823 = vmatpush1.bf16.msra.mxu0 0
        %824 = vmatprep.subr.bf16.mxu0 0
        %825 = vmatpush1.bf16.msra.mxu0 0
        %826 = vmatprep.subr.bf16.mxu0 0
        %827 = vmatpush1.bf16.msra.mxu0 0
        %828 = vmatprep.subr.bf16.mxu0 0
        %829 = vmatpush1.bf16.msra.mxu0 0
        %830 = vmatprep.subr.bf16.mxu0 0
        %831 = vmatpush1.bf16.msra.mxu0 0
        %832 = vmatprep.subr.bf16.mxu0 0
        %833 = vmatpush1.bf16.msra.mxu0 0
        %834 = vmatprep.subr.bf16.mxu0 0
        %835 = vmatpush1.bf16.msra.mxu0 0
        %836 = vmatprep.subr.bf16.mxu0 0
        %837 = vmatpush1.bf16.msra.mxu0 0
        %838 = vmatprep.subr.bf16.mxu0 0
        %839 = vmatpush1.bf16.msra.mxu0 0
        %840 = vmatprep.subr.bf16.mxu0 0
        %841 = vmatpush1.bf16.msra.mxu0 0
        %842 = vmatprep.subr.bf16.mxu0 0
        %843 = vmatpush1.bf16.msra.mxu0 0
        %844 = vmatprep.subr.bf16.mxu0 0
        %845 = vmatpush1.bf16.msra.mxu0 0
        %846 = vmatprep.subr.bf16.mxu0 0
        %847 = vmatpush1.bf16.msra.mxu0 0
        %848 = vmatprep.subr.bf16.mxu0 0
        %849 = vmatpush1.bf16.msra.mxu0 0
        %850 = vmatprep.mubr.bf16.mxu0 0
        %851 = vmatmul.mubr.bf16.gmra.mrb[0].mxu0 %v813
        %v852 = vpop.f32.mrb[0].mxu0
        %v853 = vadd.f32 0.0, %v852
        %v854 = vpop.f32.mrb[0].mxu0
        %v855 = vpop.f32.mrb[0].mxu0
        %v856 = vpop.f32.mrb[0].mxu0
        %857 = vdwg.mxu0
        %859 = vrot.lane.b32.xlu0 %v853, 24
        %v860 = vpop.permute.xlu0 %859
        %vm862 = vcmask 261312
        %863 = vst.msk [vmem:[%s304] sm:$0xff] %vm862, %v860
        %s864 = sand.u32 %s153, 1
        %s865 = scalar_lea.sflag [#allocation4], %s864
        %s866 = sand.u32 %s153, 1
        %s867 = smul.addr %s866, 8
        %s868 = scalar_lea.vmem [#allocation7], %s867
        %s869 = sand.u32 %s181, 1
        %s870 = scalar_lea.sflag [#allocation9], %s869
        %s871 = sand.u32 %s181, 1
        %s872 = smul.addr %s871, 16
        %s873 = scalar_lea.vmem [#allocation8], %s872
        // Predicated region
        $region45: #{tpu_custom_call.1} parent=35 // pred_check
          %p874 = pneg %p163
        $region46: #{tpu_custom_call.1} parent=35 // pred_check_branch
          %876 = sbr.rel (%p874) target = $region48
        $region47: #{tpu_custom_call.1} parent=35 // pred_region
          %s878 = ssub.s32 128, 128
          %879 = vsyncadd %s865, %s878
          %s880 = sadd.s32 %s31, %s32
          %s881 = smul.addr %s880, 128
          %s882 = scalar_lea.hbm %s4, %s881
          %s884 = sshll.u32 %s868, 4
          %s885 = int_to_ptr.vmem [resolvable:$true] %s884
          %887 = dma.vmem_to_hbm [thread:$0]  %s885, 128, %s882, %s865
        $region48: #{tpu_custom_call.1} parent=35 // pred_fallthru
          _
        // Predicated region
        $region49: #{tpu_custom_call.1} parent=35 // pred_check
          %p888 = pneg %p191
        $region50: #{tpu_custom_call.1} parent=35 // pred_check_branch
          %890 = sbr.rel (%p888) target = $region52
        $region51: #{tpu_custom_call.1} parent=35 // pred_region
          %s891 = smul.u32 4, %s31
          %s893 = ssub.s32 256, 256
          %894 = vsyncadd %s870, %s893
          %s895 = smul.addr %s32, 4
          %s896 = sadd.s32 %s891, %s895
          %s897 = smul.addr %s896, 64
          %s898 = scalar_lea.hbm %s5, %s897
          %s899 = sshll.u32 %s873, 4
          %s900 = int_to_ptr.vmem [resolvable:$true] %s899
          %905 = dma.vmem_to_hbm [thread:$0]  %s900, 256, %s898, %s870, 64, 64, 4
        $region52: #{tpu_custom_call.1} parent=35 // pred_fallthru
          _
      $region36: #{tpu_custom_call.1} parent=5 // pred_fallthru
        _
      %p906 = scmp.le.s32.totalorder 2, %s22
      // Predicated region
      $region53: #{tpu_custom_call.1} parent=5 // pred_check
        %p907 = pneg %p906
      $region54: #{tpu_custom_call.1} parent=5 // pred_check_branch
        %909 = sbr.rel (%p907) target = $region56
      $region55: #{tpu_custom_call.1} parent=5 // pred_region
        %s910 = ssub.s32 %s22, 2
        // Predicated region
        $region57: #{tpu_custom_call.1} parent=55 // pred_check
          %p911 = pneg %p169
        $region58: #{tpu_custom_call.1} parent=55 // pred_check_branch
          %913 = sbr.rel (%p911) target = $region60
        $region59: #{tpu_custom_call.1} parent=55 // pred_region
          %s914 = sand.u32 %s154, 1
          %s915 = scalar_lea.sflag [#allocation4], %s914
          %s916 = sand.u32 %s154, 1
          %s917 = smul.addr %s916, 8
          %s918 = scalar_lea.vmem [#allocation7], %s917
          %919 = dma.done %s915, 128
        $region60: #{tpu_custom_call.1} parent=55 // pred_fallthru
          _
        // Predicated region
        $region61: #{tpu_custom_call.1} parent=55 // pred_check
          %p920 = pneg %p197
        $region62: #{tpu_custom_call.1} parent=55 // pred_check_branch
          %922 = sbr.rel (%p920) target = $region64
        $region63: #{tpu_custom_call.1} parent=55 // pred_region
          %s923 = sand.u32 %s182, 1
          %s924 = scalar_lea.sflag [#allocation9], %s923
          %s925 = sand.u32 %s182, 1
          %s926 = smul.addr %s925, 16
          %s927 = scalar_lea.vmem [#allocation8], %s926
          %928 = dma.done %s924, 256
        $region64: #{tpu_custom_call.1} parent=55 // pred_fallthru
          _
      $region56: #{tpu_custom_call.1} parent=5 // pred_fallthru
        _
    $region6: #{tpu_custom_call.1} parent=1 // loop_footer
      %s26 = sadd.s32 1, %s22
    $region7: #{tpu_custom_call.1} parent=1 // loop_footer_branch
      %21 = sbr.rel target = $region3
    $region8: #{tpu_custom_call.1} parent=1 // loop_exit
      _
    %929 = vsyncpa [#allocation3], 1
    %s930 = scalar_lea.sflag [#allocation3], 1
    %931 = vsyncpa %s930, 1
    %932 = vsyncpa [#allocation6], 1
    %933 = vsyncpa [#allocation4], 1
    %s934 = scalar_lea.sflag [#allocation4], 1
    %935 = vsyncpa %s934, 1
    %936 = vsyncpa [#allocation9], 1
    %s937 = scalar_lea.sflag [#allocation9], 1
    %938 = vsyncpa %s937, 1

</llo_original>
